<compile_context>
chip_gen: v7x
topology: tpu7x:2x2x1
jax: 0.10.0
libtpu: 0.0.40
codegen_flags: <defaults>
</compile_context>

<pallas_src>
import jax
import jax.numpy as jnp
from jax.experimental import pallas as pl
from jax.experimental.pallas import tpu as pltpu

IN_FEATURES = 324   # HOG feature length (unpadded; Mosaic tiles K internally)
C_PAD = 128         # padded output lanes (n_classes -> 128; one full lane group)


def _one_layer_kernel(x_ref, w_ref, b_ref, o_ref):
    # x_ref: (TB, 324)  w_ref: (324, C_PAD)  b_ref: (1, C_PAD)  o_ref: (TB, C_PAD)
    # Cast activations to the weight dtype (bf16 by default) on the VPU; the
    # MXU then runs its native low-precision path with an f32 accumulator.
    x = x_ref[...].astype(w_ref.dtype)
    acc = jnp.dot(x, w_ref[...], preferred_element_type=jnp.float32)
    o_ref[...] = (acc + b_ref[...]).astype(o_ref.dtype)


def prepare_params(w_torch, b, *, c_pad=C_PAD, param_dtype=jnp.bfloat16):
    """One-time parameter setup (do NOT call per forward pass).

    w_torch: (n_classes, 324) -- PyTorch Linear.weight layout
    b:       (n_classes,)
    Returns:
      w_padded: (324, c_pad) in `param_dtype` (bf16 by default), zero-padded
                output columns so padded lanes are exact zeros.
      b_padded: (1, c_pad) float32.
    """
    C, F = w_torch.shape
    w_padded = (
        jnp.zeros((F, c_pad), param_dtype).at[:, :C].set(w_torch.T.astype(param_dtype))
    )
    b_padded = jnp.zeros((1, c_pad), jnp.float32).at[0, :C].set(b.astype(jnp.float32))
    return w_padded, b_padded


def _pick_block_b(B, *, max_block=1024, min_steps=4):
    """Largest batch tile in [128, max_block] that still gives >= min_steps
    grid steps (pipelining + work for both v7x TensorCores); falls back to 128."""
    for cand in (1024, 512, 256, 128):
        if cand <= max_block and pl.cdiv(B, cand) >= min_steps:
            return cand
    return 128


def one_layer_forward(x, w_padded, b_padded, n_classes, *, block_b=None,
                      slice_output=True):
    """Eval-mode OneLayer forward: (x @ W + b)[:, :n_classes].

    x:        (B, 324) float32 (or bf16 straight from the HOG producer)
    w_padded: (324, C_PAD) bf16/f32 from prepare_params()
    b_padded: (1, C_PAD) float32 from prepare_params()
    """
    B, F = x.shape
    Fw, C = w_padded.shape
    assert F == Fw and b_padded.shape == (1, C)

    if B <= 256:
        # Small batch: single grid-less invocation, whole arrays in VMEM
        # (well under 1 MiB), no pipeline machinery / per-step overhead.
        out = pl.pallas_call(
            _one_layer_kernel,
            out_shape=jax.ShapeDtypeStruct((B, C), jnp.float32),
            in_specs=[
                pl.BlockSpec(memory_space=pltpu.MemorySpace.VMEM),
                pl.BlockSpec(memory_space=pltpu.MemorySpace.VMEM),
                pl.BlockSpec(memory_space=pltpu.MemorySpace.VMEM),
            ],
            out_specs=pl.BlockSpec(memory_space=pltpu.MemorySpace.VMEM),
        )(x, w_padded, b_padded)
    else:
        # Large batch: tile the batch axis with a cdiv grid (uneven last tile
        # is masked by Pallas, so any B works with bounded VMEM).  Weight and
        # bias stay resident in VMEM via grid-invariant index_maps.
        if block_b is None:
            block_b = _pick_block_b(B)
        grid = (pl.cdiv(B, block_b),)
        out = pl.pallas_call(
            _one_layer_kernel,
            out_shape=jax.ShapeDtypeStruct((B, C), jnp.float32),
            grid=grid,
            in_specs=[
                pl.BlockSpec((block_b, F), lambda i: (i, 0)),
                pl.BlockSpec((F, C), lambda i: (0, 0)),
                pl.BlockSpec((1, C), lambda i: (0, 0)),
            ],
            out_specs=pl.BlockSpec((block_b, C), lambda i: (i, 0)),
            # "parallel" is safe on all generations; on v7x, CORE_PARALLEL on
            # this axis is the tuning knob if profiling shows one idle TC.
            compiler_params=pltpu.CompilerParams(
                dimension_semantics=("parallel",)
            ),
        )(x, w_padded, b_padded)

    return out[:, :n_classes] if slice_output else out


if __name__ == "__main__":
    n_classes = 10
    in_features = IN_FEATURES

    key = jax.random.PRNGKey(0)
    kx, kw, kb, kx2 = jax.random.split(key, 4)

    # Deterministic synthetic parameters (same shapes as torch.nn.Linear(324, n_classes)).
    w_torch = jax.random.normal(kw, (n_classes, in_features), dtype=jnp.float32) * 0.05
    b = jax.random.normal(kb, (n_classes,), dtype=jnp.float32) * 0.05

    # ---- bf16-weight config (default), small batch: grid-less path ----------
    w_bf16, b_pad = prepare_params(w_torch, b)                 # one-time setup
    batch = 8
    x = jax.random.normal(kx, (batch, in_features), dtype=jnp.float32)
    out = one_layer_forward(x, w_bf16, b_pad, n_classes)
    out = jax.block_until_ready(out)
    # Reference uses the same bf16-rounded weights; residual error is only the
    # in-kernel x->bf16 cast.
    ref = jnp.dot(x, w_bf16.astype(jnp.float32)[:, :n_classes],
                  precision=jax.lax.Precision.HIGHEST) + b
    assert out.shape == (batch, n_classes)
    assert jnp.allclose(out, ref, atol=3e-2, rtol=3e-2), "bf16 small-batch mismatch"

    # ---- bf16 config, irregular batch > 256: cdiv-grid tiled path -----------
    batch2 = 264                      # 2*128 + 8 -> 3 grid steps, masked last tile
    x2 = jax.random.normal(kx2, (batch2, in_features), dtype=jnp.float32)
    out2 = one_layer_forward(x2, w_bf16, b_pad, n_classes)
    out2 = jax.block_until_ready(out2)
    ref2 = jnp.dot(x2, w_bf16.astype(jnp.float32)[:, :n_classes],
                   precision=jax.lax.Precision.HIGHEST) + b
    assert out2.shape == (batch2, n_classes)
    assert jnp.allclose(out2, ref2, atol=3e-2, rtol=3e-2), "bf16 tiled-batch mismatch"

    # ---- f32-weight config, tight-tolerance math check ----------------------
    w_f32, b_pad32 = prepare_params(w_torch, b, param_dtype=jnp.float32)
    out3 = one_layer_forward(x, w_f32, b_pad32, n_classes)
    out3 = jax.block_until_ready(out3)
    ref3 = jnp.dot(x, w_torch.T, precision=jax.lax.Precision.HIGHEST) + b
    assert jnp.allclose(out3, ref3, atol=2e-3, rtol=2e-3), "f32 mismatch vs reference"

    print("KERNEL_OK")
</pallas_src>

<mosaic_0001>
module attributes {stable_mosaic.version = 11 : i64} {
  func.func @_one_layer_kernel(%arg0: memref<8x324xf32, #tpu.memory_space<vmem>>, %arg1: memref<324x128xbf16, #tpu.memory_space<vmem>>, %arg2: memref<1x128xf32, #tpu.memory_space<vmem>>, %arg3: memref<8x128xf32, #tpu.memory_space<vmem>>) attributes {dimension_semantics = [], scalar_prefetch = 0 : i64, scratch_operands = 0 : i64, tpu.core_type = #tpu.core_type<tc>} {
    %c0 = arith.constant 0 : index
    %c0_0 = arith.constant 0 : index
    %0 = vector.load %arg0[%c0, %c0_0] : memref<8x324xf32, #tpu.memory_space<vmem>>, vector<8x324xf32>
    %1 = arith.truncf %0 : vector<8x324xf32> to vector<8x324xbf16>
    %c0_1 = arith.constant 0 : index
    %c0_2 = arith.constant 0 : index
    %2 = vector.load %arg1[%c0_1, %c0_2] : memref<324x128xbf16, #tpu.memory_space<vmem>>, vector<324x128xbf16>
    %cst = arith.constant dense<0.000000e+00> : vector<8x128xf32>
    %3 = tpu.matmul %1, %2, %cst {dimension_numbers = #tpu.dot_dimension_numbers<[1], [0], [0], [1], [0, 0, 1, 1], [], []>} : vector<8x324xbf16>, vector<324x128xbf16>, vector<8x128xf32> -> vector<8x128xf32>
    %c0_3 = arith.constant 0 : index
    %c0_4 = arith.constant 0 : index
    %4 = vector.load %arg2[%c0_3, %c0_4] : memref<1x128xf32, #tpu.memory_space<vmem>>, vector<1x128xf32>
    %5 = vector.broadcast %4 : vector<1x128xf32> to vector<8x128xf32>
    %6 = arith.addf %3, %5 : vector<8x128xf32>
    %c0_5 = arith.constant 0 : index
    %c0_6 = arith.constant 0 : index
    %7 = vector.load %arg3[%c0_5, %c0_6] : memref<8x128xf32, #tpu.memory_space<vmem>>, vector<8x128xf32>
    tpu.vector_store %arg3[%c0_5, %c0_6], %6 {strides = array<i32>} : memref<8x128xf32, #tpu.memory_space<vmem>>, vector<8x128xf32>,
    return
  }
}

</mosaic_0001>

<llo_original>
// kernel: tpu_custom_call.1
$region0: #{tpu_custom_call.1}
  #allocation0 [shape = 'u32[]', space=smem, size = 0x4, offset = 0x4, fixed_abs, tag = 'smem constant byte address 0x4 - core index']
  #allocation1 [shape = 'u32[144,128]{1,0:T(1,128)}', space=vmem, size = 0x12000, scoped, tag = 'internal scratch']
  %s0 = inlined_call_operand.hbm [shape: f32[8,324], index: 0, kind: input, shape index: {}]
  %s1 = inlined_call_operand.hbm [shape: bf16[324,128], index: 1, kind: input, shape index: {}]
  %s2 = inlined_call_operand.vmem [shape: f32[1,128], index: 2, kind: input, shape index: {}]
  %s3 = inlined_call_operand.hbm [shape: f32[8,128], index: 3, kind: output, shape index: {}]
  %s4 = sld [smem:[#allocation0]]
  $region30: #{tpu_custom_call.1} parent=0
    _
  %s6 = ssub.s32 1, %s4
  %s7 = scalar_select 0, %s6, %s4
  $region1: #{tpu_custom_call.1} parent=0
    #allocation2 [shape = 'u8[12288]{0}', space=vmem, size = 0x3000, scoped, tag = 'input window, operand 0, single buffered']
    #allocation3 [shape = 's32[1]{0}', space=sflag, size = 0x4, scoped, tag = 'scoped memory for tpu_custom_call.1']
    #allocation4 [shape = 's32[1]{0}', space=sflag, size = 0x4, scoped, tag = 'scoped memory for tpu_custom_call.1']
    #allocation5 [shape = 'u8[83968]{0}', space=vmem, size = 0x14800, scoped, tag = 'input window, operand 1, single buffered']
    #allocation6 [shape = 's32[1]{0}', space=sflag, size = 0x4, scoped, tag = 'scoped memory for tpu_custom_call.1']
    #allocation7 [shape = 'u8[4096]{0}', space=vmem, size = 0x1000, scoped, tag = 'output window, operand 0, single buffered']
    %8 = vsyncpa [#allocation3], 0
    %9 = vsyncpa [#allocation6], 0
    %10 = vsyncpa [#allocation4], 0
    // Predicated region
    $region2: #{tpu_custom_call.1} parent=1 // pred_check
      _
    $region3: #{tpu_custom_call.1} parent=1 // pred_check_branch
      %12 = sbr.rel (0) target = $region5
    $region4: #{tpu_custom_call.1} parent=1 // pred_region
      %s14 = ssub.s32 384, 384
      %15 = vsyncadd [#allocation3], %s14
      %s17 = sshll.u32 [#allocation2], 4
      %s18 = int_to_ptr.vmem [resolvable:$true] %s17
      %20 = dma.hbm_to_vmem [thread:$0]  %s0, 384, %s18, [#allocation3]
    $region5: #{tpu_custom_call.1} parent=1 // pred_fallthru
      _
    // Predicated region
    $region6: #{tpu_custom_call.1} parent=1 // pred_check
      _
    $region7: #{tpu_custom_call.1} parent=1 // pred_check_branch
      %22 = sbr.rel (0) target = $region9
    $region8: #{tpu_custom_call.1} parent=1 // pred_region
      %s24 = ssub.s32 2624, 2624
      %25 = vsyncadd [#allocation6], %s24
      %s26 = sshll.u32 [#allocation5], 4
      %s27 = int_to_ptr.vmem [resolvable:$true] %s26
      %32 = dma.hbm_to_vmem [thread:$0]  %s1, 2624, %s27, [#allocation6], 64, 64, 4
    $region9: #{tpu_custom_call.1} parent=1 // pred_fallthru
      _
    // Predicated region
    $region10: #{tpu_custom_call.1} parent=1 // pred_check
      _
    $region11: #{tpu_custom_call.1} parent=1 // pred_check_branch
      %34 = sbr.rel (0) target = $region13
    $region12: #{tpu_custom_call.1} parent=1 // pred_region
      _
    $region13: #{tpu_custom_call.1} parent=1 // pred_fallthru
      _
    // Predicated region
    $region14: #{tpu_custom_call.1} parent=1 // pred_check
      _
    $region15: #{tpu_custom_call.1} parent=1 // pred_check_branch
      %36 = sbr.rel (0) target = $region17
    $region16: #{tpu_custom_call.1} parent=1 // pred_region
      %37 = dma.done [#allocation3], 384
    $region17: #{tpu_custom_call.1} parent=1 // pred_fallthru
      _
    // Predicated region
    $region18: #{tpu_custom_call.1} parent=1 // pred_check
      _
    $region19: #{tpu_custom_call.1} parent=1 // pred_check_branch
      %39 = sbr.rel (0) target = $region21
    $region20: #{tpu_custom_call.1} parent=1 // pred_region
      %40 = dma.done [#allocation6], 2624
    $region21: #{tpu_custom_call.1} parent=1 // pred_fallthru
      _
    %v42 = vld [vmem:[#allocation2] sm:$0xff]
    %v43 = vld [vmem:[#allocation2 + $0x8] sm:$0xff]
    %v44 = vld [vmem:[#allocation2 + $0x10] sm:$0xff]
    %v45 = vpack.c.bf16 %v42, %v42
    %v46 = vpack.c.bf16 %v43, %v43
    %v47 = vpack.c.bf16 %v44, %v44
    %v48 = vld [vmem:[#allocation5] sm:$0xf]
    %v49 = vld [vmem:[#allocation5 + $0x4] sm:$0xf]
    %v50 = vld [vmem:[#allocation5 + $0x8] sm:$0xf]
    %v51 = vld [vmem:[#allocation5 + $0xc] sm:$0xf]
    %v52 = vld [vmem:[#allocation5 + $0x10] sm:$0xf]
    %v53 = vld [vmem:[#allocation5 + $0x14] sm:$0xf]
    %v54 = vld [vmem:[#allocation5 + $0x18] sm:$0xf]
    %v55 = vld [vmem:[#allocation5 + $0x1c] sm:$0xf]
    %v56 = vld [vmem:[#allocation5 + $0x20] sm:$0xf]
    %v57 = vld [vmem:[#allocation5 + $0x24] sm:$0xf]
    %v58 = vld [vmem:[#allocation5 + $0x28] sm:$0xf]
    %v59 = vld [vmem:[#allocation5 + $0x2c] sm:$0xf]
    %v60 = vld [vmem:[#allocation5 + $0x30] sm:$0xf]
    %v61 = vld [vmem:[#allocation5 + $0x34] sm:$0xf]
    %v62 = vld [vmem:[#allocation5 + $0x38] sm:$0xf]
    %v63 = vld [vmem:[#allocation5 + $0x3c] sm:$0xf]
    %v64 = vld [vmem:[#allocation5 + $0x40] sm:$0xf]
    %v65 = vld [vmem:[#allocation5 + $0x44] sm:$0xf]
    %v66 = vld [vmem:[#allocation5 + $0x48] sm:$0xf]
    %v67 = vld [vmem:[#allocation5 + $0x4c] sm:$0xf]
    %v68 = vld [vmem:[#allocation5 + $0x50] sm:$0xf]
    %v69 = vld [vmem:[#allocation5 + $0x54] sm:$0xf]
    %v70 = vld [vmem:[#allocation5 + $0x58] sm:$0xf]
    %v71 = vld [vmem:[#allocation5 + $0x5c] sm:$0xf]
    %v72 = vld [vmem:[#allocation5 + $0x60] sm:$0xf]
    %v73 = vld [vmem:[#allocation5 + $0x64] sm:$0xf]
    %v74 = vld [vmem:[#allocation5 + $0x68] sm:$0xf]
    %v75 = vld [vmem:[#allocation5 + $0x6c] sm:$0xf]
    %v76 = vld [vmem:[#allocation5 + $0x70] sm:$0xf]
    %v77 = vld [vmem:[#allocation5 + $0x74] sm:$0xf]
    %v78 = vld [vmem:[#allocation5 + $0x78] sm:$0xf]
    %v79 = vld [vmem:[#allocation5 + $0x7c] sm:$0xf]
    %v80 = vld [vmem:[#allocation5 + $0x80] sm:$0xf]
    %v81 = vld [vmem:[#allocation5 + $0x84] sm:$0xf]
    %v82 = vld [vmem:[#allocation5 + $0x88] sm:$0xf]
    %v83 = vld [vmem:[#allocation5 + $0x8c] sm:$0xf]
    %v84 = vld [vmem:[#allocation5 + $0x90] sm:$0xf]
    %v85 = vld [vmem:[#allocation5 + $0x94] sm:$0xf]
    %v86 = vld [vmem:[#allocation5 + $0x98] sm:$0xf]
    %v87 = vld [vmem:[#allocation5 + $0x9c] sm:$0xf]
    %v88 = vld [vmem:[#allocation5 + $0xa0] sm:$0x3]
    %v89 = vld [vmem:[%s2] sm:$0x1]
    %v91 = vlaneseq
    %v92 = vshrl.u32 %v91, 7
    %v93 = vsub.s32 0, %v92
    %v94 = vrot.slane %v89, %v93
    %v137 = vunpack.c.l.b16 %v48
    %v138 = vunpack.c.l.b16 %v49
    %v139 = vunpack.c.l.b16 %v50
    %v140 = vunpack.c.l.b16 %v51
    %v141 = vunpack.c.l.b16 %v52
    %v142 = vunpack.c.l.b16 %v53
    %v143 = vunpack.c.l.b16 %v54
    %v144 = vunpack.c.l.b16 %v55
    %v145 = vunpack.c.l.b16 %v56
    %v146 = vunpack.c.l.b16 %v57
    %v147 = vunpack.c.l.b16 %v58
    %v148 = vunpack.c.l.b16 %v59
    %v149 = vunpack.c.l.b16 %v60
    %v150 = vunpack.c.l.b16 %v61
    %v151 = vunpack.c.l.b16 %v62
    %v152 = vunpack.c.l.b16 %v63
    %v153 = vunpack.c.l.b16 %v64
    %v154 = vunpack.c.l.b16 %v65
    %v155 = vunpack.c.l.b16 %v66
    %v156 = vunpack.c.l.b16 %v67
    %v157 = vunpack.c.l.b16 %v68
    %v158 = vunpack.c.l.b16 %v69
    %v159 = vunpack.c.l.b16 %v70
    %v160 = vunpack.c.l.b16 %v71
    %v161 = vunpack.c.l.b16 %v72
    %v162 = vunpack.c.l.b16 %v73
    %v163 = vunpack.c.l.b16 %v74
    %v164 = vunpack.c.l.b16 %v75
    %v165 = vunpack.c.l.b16 %v76
    %v166 = vunpack.c.l.b16 %v77
    %v167 = vunpack.c.l.b16 %v78
    %v168 = vunpack.c.l.b16 %v79
    %v169 = vunpack.c.l.b16 %v80
    %v170 = vunpack.c.l.b16 %v81
    %v171 = vunpack.c.l.b16 %v82
    %v172 = vunpack.c.l.b16 %v83
    %v173 = vunpack.c.l.b16 %v84
    %v174 = vunpack.c.l.b16 %v85
    %v175 = vunpack.c.l.b16 %v86
    %v176 = vunpack.c.l.b16 %v87
    %v177 = vunpack.c.l.b16 %v88
    %v178 = vpack.c.b16 %v138, %v137
    %v179 = vpack.c.b16 %v140, %v139
    %v180 = vpack.c.b16 %v142, %v141
    %v181 = vpack.c.b16 %v144, %v143
    %v182 = vpack.c.b16 %v146, %v145
    %v183 = vpack.c.b16 %v148, %v147
    %v184 = vpack.c.b16 %v150, %v149
    %v185 = vpack.c.b16 %v152, %v151
    %v186 = vpack.c.b16 %v154, %v153
    %v187 = vpack.c.b16 %v156, %v155
    %v188 = vpack.c.b16 %v158, %v157
    %v189 = vpack.c.b16 %v160, %v159
    %v190 = vpack.c.b16 %v162, %v161
    %v191 = vpack.c.b16 %v164, %v163
    %v192 = vpack.c.b16 %v166, %v165
    %v193 = vpack.c.b16 %v168, %v167
    %v194 = vpack.c.b16 %v170, %v169
    %v195 = vpack.c.b16 %v172, %v171
    %v196 = vpack.c.b16 %v174, %v173
    %v197 = vpack.c.b16 %v176, %v175
    %v198 = vpack.c.b16 %v177, %v177
    %vm219 = vcmask 556032
    %v221 = vsel %vm219, %v47, 0
    %vm223 = vcmask 1041408
    %v225 = vsel %vm223, %v198, 0
    %227 = vmatprep.subr.bf16.mxu0 0
    %228 = vmatpush1.bf16.msra.mxu0 %v178
    %229 = vmatprep.subr.bf16.mxu0 0
    %230 = vmatpush1.bf16.msra.mxu0 %v179
    %231 = vmatprep.subr.bf16.mxu0 0
    %232 = vmatpush1.bf16.msra.mxu0 %v180
    %233 = vmatprep.subr.bf16.mxu0 0
    %234 = vmatpush1.bf16.msra.mxu0 %v181
    %235 = vmatprep.subr.bf16.mxu0 0
    %236 = vmatpush1.bf16.msra.mxu0 %v182
    %237 = vmatprep.subr.bf16.mxu0 0
    %238 = vmatpush1.bf16.msra.mxu0 %v183
    %239 = vmatprep.subr.bf16.mxu0 0
    %240 = vmatpush1.bf16.msra.mxu0 %v184
    %241 = vmatprep.subr.bf16.mxu0 0
    %242 = vmatpush1.bf16.msra.mxu0 %v185
    %243 = vmatprep.subr.bf16.mxu0 0
    %244 = vmatpush1.bf16.msra.mxu0 %v186
    %245 = vmatprep.subr.bf16.mxu0 0
    %246 = vmatpush1.bf16.msra.mxu0 %v187
    %247 = vmatprep.subr.bf16.mxu0 0
    %248 = vmatpush1.bf16.msra.mxu0 %v188
    %249 = vmatprep.subr.bf16.mxu0 0
    %250 = vmatpush1.bf16.msra.mxu0 %v189
    %251 = vmatprep.subr.bf16.mxu0 0
    %252 = vmatpush1.bf16.msra.mxu0 %v190
    %253 = vmatprep.subr.bf16.mxu0 0
    %254 = vmatpush1.bf16.msra.mxu0 %v191
    %255 = vmatprep.subr.bf16.mxu0 0
    %256 = vmatpush1.bf16.msra.mxu0 %v192
    %257 = vmatprep.subr.bf16.mxu0 0
    %258 = vmatpush1.bf16.msra.mxu0 %v193
    %259 = vmatprep.mubr.bf16.mxu0 %v46
    %260 = vmatmul.mubr.bf16.gmra.mrb[0].mxu0 %v45
    %v261 = vpop.f32.mrb[0].mxu0
    %v262 = vadd.f32 %v94, %v261
    %v263 = vpop.f32.mrb[0].mxu0
    %v264 = vpop.f32.mrb[0].mxu0
    %v265 = vpop.f32.mrb[0].mxu0
    %266 = vdwg.mxu0
    %267 = vmatprep.subr.bf16.mxu0 0
    %268 = vmatpush1.bf16.msra.mxu0 %v194
    %269 = vmatprep.subr.bf16.mxu0 0
    %270 = vmatpush1.bf16.msra.mxu0 %v195
    %271 = vmatprep.subr.bf16.mxu0 0
    %272 = vmatpush1.bf16.msra.mxu0 %v196
    %273 = vmatprep.subr.bf16.mxu0 0
    %274 = vmatpush1.bf16.msra.mxu0 %v197
    %275 = vmatprep.subr.bf16.mxu0 0
    %276 = vmatpush1.bf16.msra.mxu0 %v225
    %277 = vmatprep.subr.bf16.mxu0 0
    %278 = vmatpush1.bf16.msra.mxu0 0
    %279 = vmatprep.subr.bf16.mxu0 0
    %280 = vmatpush1.bf16.msra.mxu0 0
    %281 = vmatprep.subr.bf16.mxu0 0
    %282 = vmatpush1.bf16.msra.mxu0 0
    %283 = vmatprep.subr.bf16.mxu0 0
    %284 = vmatpush1.bf16.msra.mxu0 0
    %285 = vmatprep.subr.bf16.mxu0 0
    %286 = vmatpush1.bf16.msra.mxu0 0
    %287 = vmatprep.subr.bf16.mxu0 0
    %288 = vmatpush1.bf16.msra.mxu0 0
    %289 = vmatprep.subr.bf16.mxu0 0
    %290 = vmatpush1.bf16.msra.mxu0 0
    %291 = vmatprep.subr.bf16.mxu0 0
    %292 = vmatpush1.bf16.msra.mxu0 0
    %293 = vmatprep.subr.bf16.mxu0 0
    %294 = vmatpush1.bf16.msra.mxu0 0
    %295 = vmatprep.subr.bf16.mxu0 0
    %296 = vmatpush1.bf16.msra.mxu0 0
    %297 = vmatprep.subr.bf16.mxu0 0
    %298 = vmatpush1.bf16.msra.mxu0 0
    %299 = vmatprep.mubr.bf16.mxu0 0
    %300 = vmatmul.mubr.bf16.gmra.mrb[0].mxu0 %v221
    %v301 = vpop.f32.mrb[0].mxu0
    %v302 = vadd.f32 %v262, %v301
    %v303 = vpop.f32.mrb[0].mxu0
    %v304 = vpop.f32.mrb[0].mxu0
    %v305 = vpop.f32.mrb[0].mxu0
    %306 = vdwg.mxu0
    %307 = vst [vmem:[#allocation7] sm:$0xff] %v302
    // Predicated region
    $region22: #{tpu_custom_call.1} parent=1 // pred_check
      _
    $region23: #{tpu_custom_call.1} parent=1 // pred_check_branch
      %309 = sbr.rel (0) target = $region25
    $region24: #{tpu_custom_call.1} parent=1 // pred_region
      %s311 = ssub.s32 128, 128
      %312 = vsyncadd [#allocation4], %s311
      %s314 = sshll.u32 [#allocation7], 4
      %s315 = int_to_ptr.vmem [resolvable:$true] %s314
      %317 = dma.vmem_to_hbm [thread:$0]  %s315, 128, %s3, [#allocation4]
    $region25: #{tpu_custom_call.1} parent=1 // pred_fallthru
      _
    // Predicated region
    $region26: #{tpu_custom_call.1} parent=1 // pred_check
      _
    $region27: #{tpu_custom_call.1} parent=1 // pred_check_branch
      %319 = sbr.rel (0) target = $region29
    $region28: #{tpu_custom_call.1} parent=1 // pred_region
      %320 = dma.done [#allocation4], 128
    $region29: #{tpu_custom_call.1} parent=1 // pred_fallthru
      _
    %321 = vsyncpa [#allocation3], 1
    %322 = vsyncpa [#allocation6], 1
    %323 = vsyncpa [#allocation4], 1

</llo_original>
